<compile_context>
chip_gen: v7x
topology: tpu7x:2x2x1
jax: 0.10.0
libtpu: 0.0.40
codegen_flags: <defaults>
</compile_context>

<pallas_src>
import functools

import jax
import jax.numpy as jnp
from jax.experimental import pallas as pl
from jax.experimental.pallas import tpu as pltpu


def _rdrop_partial_kernel(y_ref, *rest, c, h_total, compute_ce, needs_mask):
    """Per-tile partial sums for the R-Drop loss.

    y_ref:   (tm, 2*c) logits block (any float dtype); lanes [0:c] are the
             even rows (forward pass 1), lanes [c:2c] the odd rows (pass 2).
             `c` is already padded to a multiple of 128 by the wrapper.
    l_ref:   (tm, 2) int32 labels block (only when compute_ce=True).
    out_ref: (1, 8, 128) f32 partials; lane 0 = -sum(logp[row, label]) over
             both passes, lane 1 = sum over the tile of (p1-p2)*(lp1-lp2).
    """
    if compute_ce:
        l_ref, out_ref = rest
    else:
        (out_ref,) = rest

    # Slice each forward pass directly from the ref (lane offset c is a
    # multiple of 128 -> clean split) and upcast; avoids materialising a full
    # (tm, 2c) f32 temporary.
    y1 = y_ref[:, :c].astype(jnp.float32)        # (tm, c)
    y2 = y_ref[:, c:].astype(jnp.float32)        # (tm, c)
    tm = y1.shape[0]

    def softmax_and_logsoftmax(x):
        m = jnp.max(x, axis=-1, keepdims=True)
        z = x - m
        e = jnp.exp(z)                           # single exp per logit (EUP)
        s = jnp.sum(e, axis=-1, keepdims=True)
        lp = z - jnp.log(s)                      # log_softmax
        p = e * pl.reciprocal(s, approx=True)    # softmax; rcp on the EUP
        return p, lp

    p1, lp1 = softmax_and_logsoftmax(y1)
    p2, lp2 = softmax_and_logsoftmax(y2)

    # Symmetric KL: p2*(lp2-lp1) + p1*(lp1-lp2) == (p1-p2)*(lp1-lp2).
    # Reduce over the class axis first; masking happens at row granularity.
    kl_row = jnp.sum((p1 - p2) * (lp1 - lp2), axis=-1, keepdims=True)  # (tm,1)

    if compute_ce:
        cls = jax.lax.broadcasted_iota(jnp.int32, (tm, c), 1)
        labels = l_ref[...]                                            # (tm,2)
        ce_row = -(jnp.sum(jnp.where(cls == labels[:, 0:1], lp1, 0.0),
                           axis=-1, keepdims=True)
                   + jnp.sum(jnp.where(cls == labels[:, 1:2], lp2, 0.0),
                             axis=-1, keepdims=True))                  # (tm,1)
    else:
        ce_row = jnp.zeros_like(kl_row)

    if needs_mask:
        # Only emitted when h % tm != 0: zero garbage rows of the padded last
        # tile (NaN-safe) with a single (tm, 1) select after the reduction.
        i = pl.program_id(0)
        rows = jax.lax.broadcasted_iota(jnp.int32, (tm, 1), 0) + i * tm
        valid = rows < h_total
        kl_row = jnp.where(valid, kl_row, 0.0)
        ce_row = jnp.where(valid, ce_row, 0.0)

    ce_part = jnp.sum(ce_row)
    kl_part = jnp.sum(kl_row)

    lane = jax.lax.broadcasted_iota(jnp.int32, (1, 8, 128), 2)
    out_ref[...] = jnp.where(lane == 0, ce_part,
                             jnp.where(lane == 1, kl_part, 0.0))


def _tpu_budgets():
    """Per-generation (target f32 slab elements, scoped vmem_limit_bytes)."""
    try:
        phys = pltpu.get_tpu_info().vmem_capacity_bytes
    except Exception:
        phys = 64 * 1024 * 1024            # assume the tightest chip (v7x)
    if phys <= 64 * 1024 * 1024:
        # v7x: 64 MiB VMEM per TC -> ~2 MiB slab, 48 MiB scoped budget.
        return 512 * 1024, 48 * 1024 * 1024
    # v5e / v6e: 128 MiB physical, HBM/DMA-bound here -> ~4 MiB slab.
    return 1024 * 1024, 80 * 1024 * 1024


def _pick_row_tile(h, c_pad, target_elems):
    """Rows per grid step: ~target_elems f32 per (tm, c_pad) slab."""
    tm = (target_elems // max(c_pad, 1)) // 8 * 8
    tm = max(8, min(4096, tm))
    if h <= tm:
        if h > 8:
            # Split into >= 2 tiles so the "parallel" row axis can shard
            # across both v7x TensorCores (negligible cost on 1-TC chips).
            half = -(-h // 2)                       # ceil(h / 2)
            half = -(-half // 8) * 8                # round up to sublanes
            if half < h:
                return half
        return h                                    # single full-extent tile
    return tm


def rdrop_loss(y_pred, labels=None, ce_loss=None, *, alpha=4, row_tile=None):
    """Pallas implementation of RDropLoss.forward(y_pred, labels, ce_loss)."""
    n, c = y_pred.shape
    assert n % 2 == 0, "R-Drop expects paired rows (even batch size)."
    h = n // 2
    compute_ce = ce_loss is None
    if compute_ce and labels is None:
        raise ValueError("labels are required when ce_loss is not provided")

    # Pad the class axis to a lane multiple with a large *finite* negative:
    # padded classes get p == 0 exactly and a finite logp, so CE and KL are
    # unchanged while every (tm, c) temporary stays lane-dense.
    c_pad = max(128, -(-c // 128) * 128)
    if c_pad != c:
        y_pred = jnp.pad(y_pred, ((0, 0), (0, c_pad - c)),
                         constant_values=-1e9)

    # Free, contiguous views -- no strided gather copies before the kernel.
    y_pairs = y_pred.reshape(h, 2 * c_pad)

    target_elems, vmem_limit = _tpu_budgets()
    if row_tile is not None:
        tm = h if row_tile >= h else max(8, (row_tile // 8) * 8)
    else:
        tm = _pick_row_tile(h, c_pad, target_elems)
    num_tiles = pl.cdiv(h, tm)
    needs_mask = (h % tm) != 0

    in_specs = [pl.BlockSpec((tm, 2 * c_pad), lambda i: (i, 0))]
    args = [y_pairs]
    if compute_ce:
        in_specs.append(pl.BlockSpec((tm, 2), lambda i: (i, 0)))
        args.append(labels.astype(jnp.int32).reshape(h, 2))

    partials = pl.pallas_call(
        functools.partial(_rdrop_partial_kernel, c=c_pad, h_total=h,
                          compute_ce=compute_ce, needs_mask=needs_mask),
        out_shape=jax.ShapeDtypeStruct((num_tiles, 8, 128), jnp.float32),
        grid_spec=pltpu.PrefetchScalarGridSpec(
            num_scalar_prefetch=0,
            grid=(num_tiles,),
            in_specs=in_specs,
            out_specs=pl.BlockSpec((1, 8, 128), lambda i: (i, 0, 0)),
        ),
        compiler_params=pltpu.CompilerParams(
            dimension_semantics=("parallel",),
            vmem_limit_bytes=vmem_limit,
        ),
    )(*args)

    ce_sum = jnp.sum(partials[:, 0, 0])
    kl_sum = jnp.sum(partials[:, 0, 1])

    loss1 = ce_sum / jnp.float32(n) if compute_ce else ce_loss
    loss2_mean = kl_sum / jnp.float32(h * c)       # mean over original (h, c)
    return loss1 + loss2_mean / 4.0 * jnp.float32(alpha)


def _rdrop_loss_ref(y_pred, labels=None, ce_loss=None, *, alpha=4):
    """Pure-JAX reference mirroring the PyTorch module."""
    y32 = y_pred.astype(jnp.float32)
    if ce_loss is None:
        logp = jax.nn.log_softmax(y32, axis=1)
        loss1 = -jnp.mean(jnp.take_along_axis(logp, labels[:, None], axis=1))
    else:
        loss1 = ce_loss
    y1, y2 = y32[0::2], y32[1::2]
    lp1, lp2 = jax.nn.log_softmax(y1, axis=1), jax.nn.log_softmax(y2, axis=1)
    p1, p2 = jax.nn.softmax(y1, axis=-1), jax.nn.softmax(y2, axis=-1)
    kl = p2 * (lp2 - lp1) + p1 * (lp1 - lp2)
    return loss1 + jnp.mean(kl) / 4.0 * alpha


if __name__ == "__main__":
    key = jax.random.PRNGKey(0)

    # 1) Small paired batch, CE computed in-kernel, single full-extent tile.
    k1, k2 = jax.random.split(key)
    y = jax.random.normal(k1, (8, 32), dtype=jnp.float32)
    lab = jax.random.randint(k2, (8,), 0, 32, dtype=jnp.int32)
    out = jax.block_until_ready(rdrop_loss(y, lab, alpha=4))
    ref = jax.block_until_ready(_rdrop_loss_ref(y, lab, alpha=4))
    assert jnp.allclose(out, ref, rtol=2e-3, atol=2e-3), (out, ref)

    # 2) Multi-tile grid with a ragged last tile and a non-multiple-of-128
    #    class count (exercises class padding + post-reduction row masking).
    k3, k4 = jax.random.split(k2)
    y = jax.random.normal(k3, (52, 40), dtype=jnp.float32)
    lab = jax.random.randint(k4, (52,), 0, 40, dtype=jnp.int32)
    out = jax.block_until_ready(rdrop_loss(y, lab, alpha=4, row_tile=8))
    ref = jax.block_until_ready(_rdrop_loss_ref(y, lab, alpha=4))
    assert jnp.allclose(out, ref, rtol=2e-3, atol=2e-3), (out, ref)

    # 3) ce_loss supplied (CE path compiled out), bf16 logits in HBM.
    k5, _ = jax.random.split(k4)
    y = jax.random.normal(k5, (16, 256), dtype=jnp.bfloat16)
    ce = jnp.float32(1.25)
    out = jax.block_until_ready(rdrop_loss(y, ce_loss=ce, alpha=4))
    ref = jax.block_until_ready(_rdrop_loss_ref(y, ce_loss=ce, alpha=4))
    assert jnp.allclose(out, ref, rtol=2e-3, atol=2e-3), (out, ref)

    print("KERNEL_OK")
</pallas_src>

<mosaic_0001>
module attributes {stable_mosaic.version = 11 : i64} {
  func.func @_rdrop_partial_kernel(%arg0: i32, %arg1: memref<4x256xf32, #tpu.memory_space<vmem>>, %arg2: memref<4x2xi32, #tpu.memory_space<vmem>>, %arg3: memref<1x8x128xf32, #tpu.memory_space<vmem>>) attributes {dimension_semantics = [#tpu.dimension_semantics<parallel>], iteration_bounds = array<i64: 1>, scalar_prefetch = 0 : i64, scratch_operands = 0 : i64, tpu.core_type = #tpu.core_type<tc>, window_params = [{transform_indices = @transform_0, window_bounds = array<i64: 4, 256>}, {transform_indices = @transform_1, window_bounds = array<i64: 4, 2>}, {transform_indices = @transform_2, window_bounds = array<i64: 1, 8, 128>}]} {
    %c0 = arith.constant 0 : index
    %c0_0 = arith.constant 0 : index
    %0 = vector.load %arg1[%c0, %c0_0] : memref<4x256xf32, #tpu.memory_space<vmem>>, vector<4x128xf32>
    %c0_1 = arith.constant 0 : index
    %c128 = arith.constant 128 : index
    %1 = vector.load %arg1[%c0_1, %c128] : memref<4x256xf32, #tpu.memory_space<vmem>>, vector<4x128xf32>
    %cst = arith.constant dense<0xFF800000> : vector<4xf32>
    %2 = vector.multi_reduction <maximumf>, %0, %cst [1] : vector<4x128xf32> to vector<4xf32>
    %3 = vector.shape_cast %2 : vector<4xf32> to vector<4x1xf32>
    %4 = vector.broadcast %3 : vector<4x1xf32> to vector<4x128xf32>
    %5 = arith.subf %0, %4 : vector<4x128xf32>
    %6 = math.exp %5 : vector<4x128xf32>
    %cst_2 = arith.constant dense<0.000000e+00> : vector<4xf32>
    %7 = vector.multi_reduction <add>, %6, %cst_2 [1] : vector<4x128xf32> to vector<4xf32>
    %8 = vector.shape_cast %7 : vector<4xf32> to vector<4x1xf32>
    %9 = math.log %8 : vector<4x1xf32>
    %10 = vector.broadcast %9 : vector<4x1xf32> to vector<4x128xf32>
    %11 = arith.subf %5, %10 : vector<4x128xf32>
    %12 = tpu.reciprocal %8 {approx = true} : vector<4x1xf32> -> vector<4x1xf32>
    %13 = vector.broadcast %12 : vector<4x1xf32> to vector<4x128xf32>
    %14 = arith.mulf %6, %13 : vector<4x128xf32>
    %cst_3 = arith.constant dense<0xFF800000> : vector<4xf32>
    %15 = vector.multi_reduction <maximumf>, %1, %cst_3 [1] : vector<4x128xf32> to vector<4xf32>
    %16 = vector.shape_cast %15 : vector<4xf32> to vector<4x1xf32>
    %17 = vector.broadcast %16 : vector<4x1xf32> to vector<4x128xf32>
    %18 = arith.subf %1, %17 : vector<4x128xf32>
    %19 = math.exp %18 : vector<4x128xf32>
    %cst_4 = arith.constant dense<0.000000e+00> : vector<4xf32>
    %20 = vector.multi_reduction <add>, %19, %cst_4 [1] : vector<4x128xf32> to vector<4xf32>
    %21 = vector.shape_cast %20 : vector<4xf32> to vector<4x1xf32>
    %22 = math.log %21 : vector<4x1xf32>
    %23 = vector.broadcast %22 : vector<4x1xf32> to vector<4x128xf32>
    %24 = arith.subf %18, %23 : vector<4x128xf32>
    %25 = tpu.reciprocal %21 {approx = true} : vector<4x1xf32> -> vector<4x1xf32>
    %26 = vector.broadcast %25 : vector<4x1xf32> to vector<4x128xf32>
    %27 = arith.mulf %19, %26 : vector<4x128xf32>
    %28 = arith.subf %14, %27 : vector<4x128xf32>
    %29 = arith.subf %11, %24 : vector<4x128xf32>
    %30 = arith.mulf %28, %29 : vector<4x128xf32>
    %cst_5 = arith.constant dense<0.000000e+00> : vector<4xf32>
    %31 = vector.multi_reduction <add>, %30, %cst_5 [1] : vector<4x128xf32> to vector<4xf32>
    %32 = vector.shape_cast %31 : vector<4xf32> to vector<4x1xf32>
    %33 = tpu.iota {dimensions = array<i32: 1>} : vector<4x128xi32>
    %c0_6 = arith.constant 0 : index
    %c0_7 = arith.constant 0 : index
    %34 = vector.load %arg2[%c0_6, %c0_7] : memref<4x2xi32, #tpu.memory_space<vmem>>, vector<4x2xi32>
    %35 = vector.extract_strided_slice %34 {offsets = [0, 0], sizes = [4, 1], strides = [1, 1]} : vector<4x2xi32> to vector<4x1xi32>
    %36 = vector.broadcast %35 : vector<4x1xi32> to vector<4x128xi32>
    %37 = arith.cmpi eq, %33, %36 : vector<4x128xi32>
    %cst_8 = arith.constant 0.000000e+00 : f32
    %38 = vector.broadcast %cst_8 : f32 to vector<4x128xf32>
    %39 = arith.select %37, %11, %38 : vector<4x128xi1>, vector<4x128xf32>
    %cst_9 = arith.constant dense<0.000000e+00> : vector<4xf32>
    %40 = vector.multi_reduction <add>, %39, %cst_9 [1] : vector<4x128xf32> to vector<4xf32>
    %41 = vector.shape_cast %40 : vector<4xf32> to vector<4x1xf32>
    %42 = vector.extract_strided_slice %34 {offsets = [0, 1], sizes = [4, 1], strides = [1, 1]} : vector<4x2xi32> to vector<4x1xi32>
    %43 = vector.broadcast %42 : vector<4x1xi32> to vector<4x128xi32>
    %44 = arith.cmpi eq, %33, %43 : vector<4x128xi32>
    %cst_10 = arith.constant 0.000000e+00 : f32
    %45 = vector.broadcast %cst_10 : f32 to vector<4x128xf32>
    %46 = arith.select %44, %24, %45 : vector<4x128xi1>, vector<4x128xf32>
    %cst_11 = arith.constant dense<0.000000e+00> : vector<4xf32>
    %47 = vector.multi_reduction <add>, %46, %cst_11 [1] : vector<4x128xf32> to vector<4xf32>
    %48 = vector.shape_cast %47 : vector<4xf32> to vector<4x1xf32>
    %49 = arith.addf %41, %48 : vector<4x1xf32>
    %cst_12 = arith.constant 0.000000e+00 : f32
    %50 = vector.broadcast %cst_12 : f32 to vector<4x1xf32>
    %51 = arith.subf %50, %49 : vector<4x1xf32>
    %52 = vector.shape_cast %51 : vector<4x1xf32> to vector<1x4x1xf32>
    %cst_13 = arith.constant dense<0.000000e+00> : vector<1xf32>
    %53 = vector.multi_reduction <add>, %52, %cst_13 [1, 2] : vector<1x4x1xf32> to vector<1xf32>
    %54 = vector.shape_cast %53 : vector<1xf32> to vector<1x1x1xf32>
    %55 = vector.extract %54[0, 0, 0] : f32 from vector<1x1x1xf32>
    %56 = vector.shape_cast %32 : vector<4x1xf32> to vector<1x4x1xf32>
    %cst_14 = arith.constant dense<0.000000e+00> : vector<1xf32>
    %57 = vector.multi_reduction <add>, %56, %cst_14 [1, 2] : vector<1x4x1xf32> to vector<1xf32>
    %58 = vector.shape_cast %57 : vector<1xf32> to vector<1x1x1xf32>
    %59 = vector.extract %58[0, 0, 0] : f32 from vector<1x1x1xf32>
    %60 = tpu.iota {dimensions = array<i32: 2>} : vector<1x8x128xi32>
    %c0_i32 = arith.constant 0 : i32
    %61 = vector.broadcast %c0_i32 : i32 to vector<1x8x128xi32>
    %62 = arith.cmpi eq, %60, %61 : vector<1x8x128xi32>
    %c1_i32 = arith.constant 1 : i32
    %63 = vector.broadcast %c1_i32 : i32 to vector<1x8x128xi32>
    %64 = arith.cmpi eq, %60, %63 : vector<1x8x128xi32>
    %cst_15 = arith.constant 0.000000e+00 : f32
    %65 = vector.broadcast %59 : f32 to vector<1x8x128xf32>
    %66 = vector.broadcast %cst_15 : f32 to vector<1x8x128xf32>
    %67 = arith.select %64, %65, %66 : vector<1x8x128xi1>, vector<1x8x128xf32>
    %68 = vector.broadcast %55 : f32 to vector<1x8x128xf32>
    %69 = arith.select %62, %68, %67 : vector<1x8x128xi1>, vector<1x8x128xf32>
    %c0_16 = arith.constant 0 : index
    %c0_17 = arith.constant 0 : index
    %c0_18 = arith.constant 0 : index
    %70 = vector.load %arg3[%c0_16, %c0_17, %c0_18] : memref<1x8x128xf32, #tpu.memory_space<vmem>>, vector<1x8x128xf32>
    tpu.vector_store %arg3[%c0_16, %c0_17, %c0_18], %69 {strides = array<i32>} : memref<1x8x128xf32, #tpu.memory_space<vmem>>, vector<1x8x128xf32>,
    return
  }
  func.func @transform_0(%arg0: i32) -> (i32, i32) {
    %c0_i32 = arith.constant 0 : i32
    %c0_i32_0 = arith.constant 0 : i32
    return %arg0, %c0_i32 : i32, i32
  }
  func.func @transform_1(%arg0: i32) -> (i32, i32) {
    %c0_i32 = arith.constant 0 : i32
    %c0_i32_0 = arith.constant 0 : i32
    return %arg0, %c0_i32 : i32, i32
  }
  func.func @transform_2(%arg0: i32) -> (i32, i32, i32) {
    %c0_i32 = arith.constant 0 : i32
    %c0_i32_0 = arith.constant 0 : i32
    %c0_i32_1 = arith.constant 0 : i32
    return %arg0, %c0_i32, %c0_i32_0 : i32, i32, i32
  }
}

</mosaic_0001>

<llo_original>
// kernel: tpu_custom_call.1
$region0: #{tpu_custom_call.1}
  #allocation0 [shape = 'u32[]', space=smem, size = 0x4, offset = 0x4, fixed_abs, tag = 'smem constant byte address 0x4 - core index']
  #allocation1 [shape = 'u32[144,128]{1,0:T(1,128)}', space=vmem, size = 0x12000, scoped, tag = 'internal scratch']
  %s0 = inlined_call_operand.hbm [shape: f32[4,256], index: 0, kind: input, shape index: {}]
  %s1 = inlined_call_operand.vmem [shape: s32[4,2], index: 1, kind: input, shape index: {}]
  %s2 = inlined_call_operand.hbm [shape: f32[1,8,128], index: 2, kind: output, shape index: {}]
  %s3 = sld [smem:[#allocation0]]
  $region22: #{tpu_custom_call.1} parent=0
    _
  %s5 = ssub.s32 1, %s3
  %s6 = scalar_select 0, %s5, %s3
  $region1: #{tpu_custom_call.1} parent=0
    #allocation2 [shape = 'u8[4096]{0}', space=vmem, size = 0x1000, scoped, tag = 'input window, operand 0, single buffered']
    #allocation3 [shape = 's32[1]{0}', space=sflag, size = 0x4, scoped, tag = 'scoped memory for tpu_custom_call.1']
    #allocation4 [shape = 's32[1]{0}', space=sflag, size = 0x4, scoped, tag = 'scoped memory for tpu_custom_call.1']
    #allocation5 [shape = 'u8[4096]{0}', space=vmem, size = 0x1000, scoped, tag = 'output window, operand 0, single buffered']
    %7 = vsyncpa [#allocation3], 0
    %8 = vsyncpa [#allocation4], 0
    // Predicated region
    $region2: #{tpu_custom_call.1} parent=1 // pred_check
      _
    $region3: #{tpu_custom_call.1} parent=1 // pred_check_branch
      %10 = sbr.rel (0) target = $region5
    $region4: #{tpu_custom_call.1} parent=1 // pred_region
      %s12 = ssub.s32 128, 128
      %13 = vsyncadd [#allocation3], %s12
      %s15 = sshll.u32 [#allocation2], 4
      %s16 = int_to_ptr.vmem [resolvable:$true] %s15
      %18 = dma.hbm_to_vmem [thread:$0]  %s0, 128, %s16, [#allocation3]
    $region5: #{tpu_custom_call.1} parent=1 // pred_fallthru
      _
    // Predicated region
    $region6: #{tpu_custom_call.1} parent=1 // pred_check
      _
    $region7: #{tpu_custom_call.1} parent=1 // pred_check_branch
      %20 = sbr.rel (0) target = $region9
    $region8: #{tpu_custom_call.1} parent=1 // pred_region
      _
    $region9: #{tpu_custom_call.1} parent=1 // pred_fallthru
      _
    // Predicated region
    $region10: #{tpu_custom_call.1} parent=1 // pred_check
      _
    $region11: #{tpu_custom_call.1} parent=1 // pred_check_branch
      %22 = sbr.rel (0) target = $region13
    $region12: #{tpu_custom_call.1} parent=1 // pred_region
      %23 = dma.done [#allocation3], 128
    $region13: #{tpu_custom_call.1} parent=1 // pred_fallthru
      _
    %v24 = vld [vmem:[#allocation2] sm:$0xf]
    %v25 = vld [vmem:[#allocation2 + $0x4] sm:$0xf]
    %vm26 = vcmask 1043456
    %v27 = vsel %vm26, %v24, -inf
    %28 = vmax.xlane.f32.xlu0 %v27
    %v29 = vpop.xlane.xlu0 %28
    %v30 = vsub.f32 %v24, %v29
    %v31 = vmul.f32 %v30, 1.442695
    %v32 = vpow.pop %v31
    %v33 = vsel %vm26, %v32, 0.0
    %34 = vadd.xlane.f32.xlu0 %v33
    %v35 = vpop.xlane.xlu0 %34
    %v36 = vlog2.pop %v35
    %v37 = vmul.f32 %v36, 0.6931472
    %v38 = vsub.f32 %v30, %v37
    %v39 = vrcp.pop %v35
    %v40 = vmul.f32 %v32, %v39
    %v41 = vsel %vm26, %v25, -inf
    %42 = vmax.xlane.f32.xlu0 %v41
    %v43 = vpop.xlane.xlu0 %42
    %v44 = vsub.f32 %v25, %v43
    %v45 = vmul.f32 %v44, 1.442695
    %v46 = vpow.pop %v45
    %v47 = vsel %vm26, %v46, 0.0
    %48 = vadd.xlane.f32.xlu0 %v47
    %v49 = vpop.xlane.xlu0 %48
    %v50 = vlog2.pop %v49
    %v51 = vmul.f32 %v50, 0.6931472
    %v52 = vsub.f32 %v44, %v51
    %v53 = vrcp.pop %v49
    %v54 = vmul.f32 %v46, %v53
    %v55 = vsub.f32 %v40, %v54
    %v56 = vsub.f32 %v38, %v52
    %v57 = vmul.f32 %v55, %v56
    %v58 = vsel %vm26, %v57, 0.0
    %59 = vadd.xlane.f32.xlu0 %v58
    %v60 = vpop.xlane.xlu0 %59
    %v61 = vlaneseq
    %v62 = vand.u32 %v61, 127
    %v63 = vld [vmem:[%s1] sm:$0xf]
    %64 = vset.pattern.permute.xlu0 0
    %65 = vperm.xlu0 %64, %v63
    %v66 = vpop.permute.xlu0 %65
    %vm67 = vcmp.eq.s32.totalorder %v62, %v66
    %v68 = vsel %vm67, %v38, 0.0
    %v69 = vsel %vm26, %v68, 0.0
    %70 = vadd.xlane.f32.xlu0 %v69
    %v71 = vpop.xlane.xlu0 %70
    %72 = vset.pattern.permute.xlu0 1
    %73 = vperm.xlu0 %72, %v63
    %v74 = vpop.permute.xlu0 %73
    %vm75 = vcmp.eq.s32.totalorder %v62, %v74
    %v76 = vsel %vm75, %v52, 0.0
    %v77 = vsel %vm26, %v76, 0.0
    %78 = vadd.xlane.f32.xlu0 %v77
    %v79 = vpop.xlane.xlu0 %78
    %v80 = vadd.f32 %v71, %v79
    %v81 = vsub.f32 0.0, %v80
    %vm82 = vcmask 3072
    %v83 = vsel %vm82, %v81, 0.0
    %84 = vadd.xlane.f32.xlu0 %v83
    %v85 = vpop.xlane.xlu0 %84
    %v86 = vrot.slane %v85, 4
    %v87 = vadd.f32 %v85, %v86
    %v88 = vrot.slane %v87, 2
    %v89 = vadd.f32 %v87, %v88
    %v90 = vrot.slane %v89, 1
    %v91 = vadd.f32 %v89, %v90
    %s92 = vtos %v91
    %v93 = vsel %vm82, %v60, 0.0
    %94 = vadd.xlane.f32.xlu0 %v93
    %v95 = vpop.xlane.xlu0 %94
    %v96 = vrot.slane %v95, 4
    %v97 = vadd.f32 %v95, %v96
    %v98 = vrot.slane %v97, 2
    %v99 = vadd.f32 %v97, %v98
    %v100 = vrot.slane %v99, 1
    %v101 = vadd.f32 %v99, %v100
    %s102 = vtos %v101
    %vm103 = vcmp.eq.s32.totalorder %v62, 0
    %vm104 = vcmp.eq.s32.totalorder %v62, 1
    %v105 = vstv %s102
    %v106 = vsel %vm104, %v105, 0.0
    %v107 = vstv %s92
    %v108 = vsel %vm103, %v107, %v106
    %109 = vst [vmem:[#allocation5] sm:$0xff] %v108
    // Predicated region
    $region14: #{tpu_custom_call.1} parent=1 // pred_check
      _
    $region15: #{tpu_custom_call.1} parent=1 // pred_check_branch
      %111 = sbr.rel (0) target = $region17
    $region16: #{tpu_custom_call.1} parent=1 // pred_region
      %s113 = ssub.s32 128, 128
      %114 = vsyncadd [#allocation4], %s113
      %s116 = sshll.u32 [#allocation5], 4
      %s117 = int_to_ptr.vmem [resolvable:$true] %s116
      %119 = dma.vmem_to_hbm [thread:$0]  %s117, 128, %s2, [#allocation4]
    $region17: #{tpu_custom_call.1} parent=1 // pred_fallthru
      _
    // Predicated region
    $region18: #{tpu_custom_call.1} parent=1 // pred_check
      _
    $region19: #{tpu_custom_call.1} parent=1 // pred_check_branch
      %121 = sbr.rel (0) target = $region21
    $region20: #{tpu_custom_call.1} parent=1 // pred_region
      %122 = dma.done [#allocation4], 128
    $region21: #{tpu_custom_call.1} parent=1 // pred_fallthru
      _
    %123 = vsyncpa [#allocation3], 1
    %124 = vsyncpa [#allocation4], 1

</llo_original>
